<compile_context>
chip_gen: v5e
topology: v5e:2x2
jax: 0.10.0
libtpu: 0.0.40
codegen_flags: <defaults>
</compile_context>

<pallas_src>
import functools

import jax
import jax.numpy as jnp
import numpy as np
from jax.experimental import pallas as pl
from jax.experimental.pallas import tpu as pltpu

_LANE = 128
_SUBLANE = 8


# ------------------------------ fused kernel ------------------------------- #

def _decoder_fused_kernel(*refs, num_layers, hidden_size):
    """One decode step per grid iteration; grid axis 0 is time (sequential).

    Ref layout (all VMEM):
      inputs : tok (B,1) i32 [block over T],
               emb (Vp_emb, E) bf16 [resident],
               per layer l: w_ih_t (in_l,4H) bf16, w_hh_t (H,4H) bf16, b (1,4H) f32
                            [resident, gate columns permuted to i,f,o,g],
               fc_w (H, Vpad) bf16, fc_b (1, Vpad) f32 [resident],
               h0, c0 (L,B,H) f32 [resident]
      outputs: logits (B, Vpad) f32 [block over T],
               h_out, c_out (L,B,H) f32 [constant index -> carried in VMEM,
                                         written back to HBM once at grid end]
    """
    L, H = num_layers, hidden_size
    tok_ref, emb_ref = refs[0], refs[1]
    base = 2 + 3 * L
    fcw_ref, fcb_ref = refs[base], refs[base + 1]
    h0_ref, c0_ref = refs[base + 2], refs[base + 3]
    logits_ref, h_ref, c_ref = refs[base + 4], refs[base + 5], refs[base + 6]

    t = pl.program_id(0)

    # State is carried in the constant-index output blocks; seed it on step 0.
    @pl.when(t == 0)
    def _():
        h_ref[...] = h0_ref[...]
        c_ref[...] = c0_ref[...]

    B = tok_ref.shape[0]
    vp_emb = emb_ref.shape[0]

    # Embedding gather as a tiny one-hot bf16 MXU matmul against the resident table.
    vocab_iota = jax.lax.broadcasted_iota(jnp.int32, (B, vp_emb), 1)
    one_hot = (tok_ref[...] == vocab_iota).astype(jnp.bfloat16)          # (B, Vp_emb)
    x = jnp.dot(one_hot, emb_ref[...],
                preferred_element_type=jnp.float32)                      # (B, E) f32
    # dropout: identity (eval mode)

    # Statically unrolled layer loop; h/c never leave VMEM between steps.
    for layer in range(L):
        wih_ref = refs[2 + 3 * layer]        # (in_l, 4H) bf16
        whh_ref = refs[3 + 3 * layer]        # (H, 4H)   bf16
        b_ref = refs[4 + 3 * layer]          # (1, 4H)   f32  (b_ih + b_hh)
        h_prev = h_ref[layer]                # (B, H) f32
        c_prev = c_ref[layer]

        # Two bf16 MXU pushes (no concatenate), f32 accumulate.
        gates = (jnp.dot(x.astype(jnp.bfloat16), wih_ref[...],
                         preferred_element_type=jnp.float32)
                 + jnp.dot(h_prev.astype(jnp.bfloat16), whh_ref[...],
                           preferred_element_type=jnp.float32)
                 + b_ref[...])                                           # (B, 4H) f32

        # Gate columns are pre-permuted to [i, f, o, g]:
        # sigmoid over a contiguous 96-lane region, tanh over the last 32 lanes.
        sig = jax.nn.sigmoid(gates[:, :3 * H])
        i_g = sig[:, 0 * H:1 * H]
        f_g = sig[:, 1 * H:2 * H]
        o_g = sig[:, 2 * H:3 * H]
        g_g = jnp.tanh(gates[:, 3 * H:4 * H])

        c_new = f_g * c_prev + i_g * g_g                                 # f32 elementwise
        h_new = o_g * jnp.tanh(c_new)

        h_ref[layer] = h_new
        c_ref[layer] = c_new
        x = h_new                            # inter-layer dropout: identity (eval)

    # fc on the last layer's hidden -> lane-dense 128-wide padded logits.
    logits_ref[...] = (jnp.dot(x.astype(jnp.bfloat16), fcw_ref[...],
                               preferred_element_type=jnp.float32)
                       + fcb_ref[...])


# ------------------------------ parameters --------------------------------- #

def init_decoder_params(key, output_size, embedding_size, hidden_size, num_layers):
    """Deterministic synthetic parameter init in PyTorch-convention shapes."""
    keys = jax.random.split(key, 3 + 4 * num_layers)
    params = {
        "embedding": 0.1 * jax.random.normal(
            keys[0], (output_size, embedding_size), jnp.float32),
        "fc_w": 0.1 * jax.random.normal(
            keys[1], (output_size, hidden_size), jnp.float32),
        "fc_b": 0.1 * jax.random.normal(keys[2], (output_size,), jnp.float32),
    }
    k = 3
    for layer in range(num_layers):
        in_features = embedding_size if layer == 0 else hidden_size
        params[f"w_ih_{layer}"] = 0.1 * jax.random.normal(
            keys[k], (4 * hidden_size, in_features), jnp.float32)
        params[f"w_hh_{layer}"] = 0.1 * jax.random.normal(
            keys[k + 1], (4 * hidden_size, hidden_size), jnp.float32)
        params[f"b_ih_{layer}"] = 0.1 * jax.random.normal(
            keys[k + 2], (4 * hidden_size,), jnp.float32)
        params[f"b_hh_{layer}"] = 0.1 * jax.random.normal(
            keys[k + 3], (4 * hidden_size,), jnp.float32)
        k += 4
    return params


def _reorder_ifgo_to_ifog(a, hidden_size):
    """Permute the 4H gate axis (last axis) from PyTorch [i|f|g|o] to [i|f|o|g]."""
    H = hidden_size
    return jnp.concatenate(
        [a[..., 0:2 * H], a[..., 3 * H:4 * H], a[..., 2 * H:3 * H]], axis=-1)


def prepare_decoder_params(raw, num_layers):
    """One-time re-layout of PyTorch-shaped params into the kernel layout.

    - Per-layer: W_ih^T (in_l,4H) and W_hh^T (H,4H) as bf16; biases combined into a
      single (1,4H) f32 row. Gate columns permuted to [i,f,o,g].
    - Embedding table padded along vocab to a multiple of 64 rows, stored bf16.
    - fc weight transposed to (H,V), zero-padded to (H,Vpad) bf16 with Vpad a multiple
      of 128 so the per-step logits store is lane-dense.
    """
    V, H = raw["fc_w"].shape
    V_emb, E = raw["embedding"].shape
    v_pad = ((V + _LANE - 1) // _LANE) * _LANE
    v_emb_pad = ((V_emb + 63) // 64) * 64

    prepared = {
        "embedding": jnp.zeros((v_emb_pad, E), jnp.bfloat16).at[:V_emb].set(
            raw["embedding"].astype(jnp.bfloat16)),
        "fc_w_pad": jnp.zeros((H, v_pad), jnp.bfloat16).at[:, :V].set(
            raw["fc_w"].T.astype(jnp.bfloat16)),
        "fc_b_pad": jnp.zeros((1, v_pad), jnp.float32).at[:, :V].set(
            raw["fc_b"][None, :]),
    }
    for layer in range(num_layers):
        w_ih_t = _reorder_ifgo_to_ifog(raw[f"w_ih_{layer}"].T, H)     # (in_l, 4H)
        w_hh_t = _reorder_ifgo_to_ifog(raw[f"w_hh_{layer}"].T, H)     # (H, 4H)
        b = _reorder_ifgo_to_ifog(
            (raw[f"b_ih_{layer}"] + raw[f"b_hh_{layer}"]).reshape(1, 4 * H), H)
        prepared[f"w_ih_t_{layer}"] = w_ih_t.astype(jnp.bfloat16)
        prepared[f"w_hh_t_{layer}"] = w_hh_t.astype(jnp.bfloat16)
        prepared[f"b_{layer}"] = b.astype(jnp.float32)
    return prepared


# ------------------------------ forward ------------------------------------ #

def decoder_decode(params, tokens, hidden, cell):
    """Fused multi-step decode (teacher-forced token sequence).

    tokens: (T, B) int32; hidden, cell: (num_layers, B, H).
    Each grid step reproduces Decoder.forward exactly (T=1 == the module forward).
    Returns batch-/vocab-PADDED outputs:
      logits (T, B_pad, Vpad) f32, hidden (L, B_pad, H) f32, cell (L, B_pad, H) f32.
    Keep the padded layout downstream; slice only at the very end if needed.
    """
    T, B = tokens.shape
    L, _, H = hidden.shape
    v_pad = params["fc_w_pad"].shape[1]
    v_emb_pad, E = params["embedding"].shape
    b_pad = max(_SUBLANE, ((B + _SUBLANE - 1) // _SUBLANE) * _SUBLANE)

    # One-time batch padding to the full sublane width (done once per sequence,
    # not per token; production callers should keep everything padded).
    tok_p = jnp.zeros((T, b_pad, 1), jnp.int32).at[:, :B, 0].set(tokens.astype(jnp.int32))
    h_p = jnp.zeros((L, b_pad, H), jnp.float32).at[:, :B, :].set(hidden)
    c_p = jnp.zeros((L, b_pad, H), jnp.float32).at[:, :B, :].set(cell)

    const2 = lambda t: (0, 0)
    const3 = lambda t: (0, 0, 0)

    in_specs = [
        pl.BlockSpec((None, b_pad, 1), lambda t: (t, 0, 0)),   # per-step token ids
        pl.BlockSpec((v_emb_pad, E), const2),                   # embedding (resident)
    ]
    inputs = [tok_p, params["embedding"]]
    for layer in range(L):
        in_l = E if layer == 0 else H
        in_specs += [pl.BlockSpec((in_l, 4 * H), const2),
                     pl.BlockSpec((H, 4 * H), const2),
                     pl.BlockSpec((1, 4 * H), const2)]
        inputs += [params[f"w_ih_t_{layer}"], params[f"w_hh_t_{layer}"],
                   params[f"b_{layer}"]]
    in_specs += [pl.BlockSpec((H, v_pad), const2),
                 pl.BlockSpec((1, v_pad), const2),
                 pl.BlockSpec((L, b_pad, H), const3),
                 pl.BlockSpec((L, b_pad, H), const3)]
    inputs += [params["fc_w_pad"], params["fc_b_pad"], h_p, c_p]

    out_specs = (
        pl.BlockSpec((None, b_pad, v_pad), lambda t: (t, 0, 0)),  # per-step logits
        pl.BlockSpec((L, b_pad, H), const3),                      # carried h (VMEM)
        pl.BlockSpec((L, b_pad, H), const3),                      # carried c (VMEM)
    )
    out_shape = (
        jax.ShapeDtypeStruct((T, b_pad, v_pad), jnp.float32),
        jax.ShapeDtypeStruct((L, b_pad, H), jnp.float32),
        jax.ShapeDtypeStruct((L, b_pad, H), jnp.float32),
    )

    kernel = functools.partial(_decoder_fused_kernel, num_layers=L, hidden_size=H)
    return pl.pallas_call(
        kernel,
        grid=(T,),
        in_specs=in_specs,
        out_specs=out_specs,
        out_shape=out_shape,
        compiler_params=pltpu.CompilerParams(dimension_semantics=("arbitrary",)),
    )(*inputs)


def decoder_forward(params, x_tokens, hidden, cell):
    """Single-step, module-equivalent forward: x_tokens (B,) int32."""
    logits, h, c = decoder_decode(params, x_tokens[None, :], hidden, cell)
    return logits[0], h, c


# ------------------------------ pure-JAX reference ------------------------- #

def decoder_reference_step(raw, x_tokens, hidden, cell, num_layers):
    hp = jax.lax.Precision.HIGHEST
    H = hidden.shape[-1]
    x = raw["embedding"][x_tokens]
    new_h, new_c = [], []
    for layer in range(num_layers):
        gates = (
            jnp.dot(x, raw[f"w_ih_{layer}"].T, precision=hp)
            + jnp.dot(hidden[layer], raw[f"w_hh_{layer}"].T, precision=hp)
            + raw[f"b_ih_{layer}"] + raw[f"b_hh_{layer}"])
        i_g = jax.nn.sigmoid(gates[:, 0 * H:1 * H])
        f_g = jax.nn.sigmoid(gates[:, 1 * H:2 * H])
        g_g = jnp.tanh(gates[:, 2 * H:3 * H])
        o_g = jax.nn.sigmoid(gates[:, 3 * H:4 * H])
        c_new = f_g * cell[layer] + i_g * g_g
        h_new = o_g * jnp.tanh(c_new)
        new_h.append(h_new)
        new_c.append(c_new)
        x = h_new
    pred = jnp.dot(x, raw["fc_w"].T, precision=hp) + raw["fc_b"]
    return pred, jnp.stack(new_h), jnp.stack(new_c)


def decoder_reference_decode(raw, tokens, hidden, cell, num_layers):
    preds = []
    h, c = hidden, cell
    for t in range(tokens.shape[0]):
        p, h, c = decoder_reference_step(raw, tokens[t], h, c, num_layers)
        preds.append(p)
    return jnp.stack(preds), h, c


# ---------------------------------- main ----------------------------------- #

if __name__ == "__main__":
    OUTPUT_SIZE = 50      # vocab size
    EMBEDDING_SIZE = 32
    HIDDEN_SIZE = 32
    NUM_LAYERS = 2
    BATCH = 4
    SEQ = 8               # fused decode steps in one pallas_call

    key = jax.random.PRNGKey(0)
    k_params, k_tok, k_h, k_c = jax.random.split(key, 4)

    raw_params = init_decoder_params(
        k_params, OUTPUT_SIZE, EMBEDDING_SIZE, HIDDEN_SIZE, NUM_LAYERS)
    params = prepare_decoder_params(raw_params, NUM_LAYERS)

    tokens = jax.random.randint(k_tok, (SEQ, BATCH), 0, OUTPUT_SIZE, dtype=jnp.int32)
    hidden = 0.1 * jax.random.normal(k_h, (NUM_LAYERS, BATCH, HIDDEN_SIZE), jnp.float32)
    cell = 0.1 * jax.random.normal(k_c, (NUM_LAYERS, BATCH, HIDDEN_SIZE), jnp.float32)

    decode = jax.jit(decoder_decode)
    logits_pad, new_hidden, new_cell = decode(params, tokens, hidden, cell)
    jax.block_until_ready((logits_pad, new_hidden, new_cell))

    B_PAD = new_hidden.shape[1]
    assert logits_pad.shape[0] == SEQ and logits_pad.shape[1] == B_PAD
    assert logits_pad.shape[2] % 128 == 0
    assert new_hidden.shape == (NUM_LAYERS, B_PAD, HIDDEN_SIZE)
    assert new_cell.shape == (NUM_LAYERS, B_PAD, HIDDEN_SIZE)

    ref_pred, ref_h, ref_c = decoder_reference_decode(
        raw_params, tokens, hidden, cell, NUM_LAYERS)
    np.testing.assert_allclose(
        np.asarray(logits_pad[:, :BATCH, :OUTPUT_SIZE]), np.asarray(ref_pred),
        atol=3e-3, rtol=3e-3)
    np.testing.assert_allclose(
        np.asarray(new_hidden[:, :BATCH, :]), np.asarray(ref_h), atol=3e-3, rtol=3e-3)
    np.testing.assert_allclose(
        np.asarray(new_cell[:, :BATCH, :]), np.asarray(ref_c), atol=3e-3, rtol=3e-3)

    # Single-step (T=1) path — exactly the PyTorch module's forward signature.
    step = jax.jit(decoder_forward)
    pred1, h1, c1 = step(params, tokens[0], hidden, cell)
    jax.block_until_ready((pred1, h1, c1))
    ref_p1, ref_h1, ref_c1 = decoder_reference_step(
        raw_params, tokens[0], hidden, cell, NUM_LAYERS)
    np.testing.assert_allclose(
        np.asarray(pred1[:BATCH, :OUTPUT_SIZE]), np.asarray(ref_p1),
        atol=3e-3, rtol=3e-3)
    np.testing.assert_allclose(
        np.asarray(h1[:, :BATCH, :]), np.asarray(ref_h1), atol=3e-3, rtol=3e-3)
    np.testing.assert_allclose(
        np.asarray(c1[:, :BATCH, :]), np.asarray(ref_c1), atol=3e-3, rtol=3e-3)

    print("KERNEL_OK")
</pallas_src>

<mosaic_0001>
module attributes {stable_mosaic.version = 11 : i64} {
  func.func @_decoder_fused_kernel(%arg0: i32, %arg1: memref<1x8x1xi32, #tpu.memory_space<vmem>>, %arg2: memref<64x32xbf16, #tpu.memory_space<vmem>>, %arg3: memref<32x128xbf16, #tpu.memory_space<vmem>>, %arg4: memref<32x128xbf16, #tpu.memory_space<vmem>>, %arg5: memref<1x128xf32, #tpu.memory_space<vmem>>, %arg6: memref<32x128xbf16, #tpu.memory_space<vmem>>, %arg7: memref<32x128xbf16, #tpu.memory_space<vmem>>, %arg8: memref<1x128xf32, #tpu.memory_space<vmem>>, %arg9: memref<32x128xbf16, #tpu.memory_space<vmem>>, %arg10: memref<1x128xf32, #tpu.memory_space<vmem>>, %arg11: memref<2x8x32xf32, #tpu.memory_space<vmem>>, %arg12: memref<2x8x32xf32, #tpu.memory_space<vmem>>, %arg13: memref<1x8x128xf32, #tpu.memory_space<vmem>>, %arg14: memref<2x8x32xf32, #tpu.memory_space<vmem>>, %arg15: memref<2x8x32xf32, #tpu.memory_space<vmem>>) attributes {dimension_semantics = [#tpu.dimension_semantics<arbitrary>], iteration_bounds = array<i64: 8>, scalar_prefetch = 0 : i64, scratch_operands = 0 : i64, tpu.core_type = #tpu.core_type<tc>, window_params = [{transform_indices = @transform_0, window_bounds = array<i64: 1, 8, 1>}, {pipeline_mode = #tpu.pipeline_mode<synchronous>, transform_indices = @transform_1, window_bounds = array<i64: 64, 32>}, {pipeline_mode = #tpu.pipeline_mode<synchronous>, transform_indices = @transform_2, window_bounds = array<i64: 32, 128>}, {pipeline_mode = #tpu.pipeline_mode<synchronous>, transform_indices = @transform_3, window_bounds = array<i64: 32, 128>}, {pipeline_mode = #tpu.pipeline_mode<synchronous>, transform_indices = @transform_4, window_bounds = array<i64: 1, 128>}, {pipeline_mode = #tpu.pipeline_mode<synchronous>, transform_indices = @transform_5, window_bounds = array<i64: 32, 128>}, {pipeline_mode = #tpu.pipeline_mode<synchronous>, transform_indices = @transform_6, window_bounds = array<i64: 32, 128>}, {pipeline_mode = #tpu.pipeline_mode<synchronous>, transform_indices = @transform_7, window_bounds = array<i64: 1, 128>}, {pipeline_mode = #tpu.pipeline_mode<synchronous>, transform_indices = @transform_8, window_bounds = array<i64: 32, 128>}, {pipeline_mode = #tpu.pipeline_mode<synchronous>, transform_indices = @transform_9, window_bounds = array<i64: 1, 128>}, {pipeline_mode = #tpu.pipeline_mode<synchronous>, transform_indices = @transform_10, window_bounds = array<i64: 2, 8, 32>}, {pipeline_mode = #tpu.pipeline_mode<synchronous>, transform_indices = @transform_11, window_bounds = array<i64: 2, 8, 32>}, {transform_indices = @transform_12, window_bounds = array<i64: 1, 8, 128>}, {pipeline_mode = #tpu.pipeline_mode<synchronous>, transform_indices = @transform_13, window_bounds = array<i64: 2, 8, 32>}, {pipeline_mode = #tpu.pipeline_mode<synchronous>, transform_indices = @transform_14, window_bounds = array<i64: 2, 8, 32>}]} {
    %c0_i32 = arith.constant 0 : i32
    %0 = arith.cmpi eq, %arg0, %c0_i32 : i32
    %1 = arith.extui %0 : i1 to i32
    %c0_i32_0 = arith.constant 0 : i32
    %2 = arith.cmpi ne, %1, %c0_i32_0 : i32
    scf.if %2 {
      %c0_54 = arith.constant 0 : index
      %c0_55 = arith.constant 0 : index
      %c0_56 = arith.constant 0 : index
      %94 = vector.load %arg11[%c0_54, %c0_55, %c0_56] : memref<2x8x32xf32, #tpu.memory_space<vmem>>, vector<2x8x32xf32>
      %c0_57 = arith.constant 0 : index
      %c0_58 = arith.constant 0 : index
      %c0_59 = arith.constant 0 : index
      %95 = vector.load %arg14[%c0_57, %c0_58, %c0_59] : memref<2x8x32xf32, #tpu.memory_space<vmem>>, vector<2x8x32xf32>
      tpu.vector_store %arg14[%c0_57, %c0_58, %c0_59], %94 {strides = array<i32>} : memref<2x8x32xf32, #tpu.memory_space<vmem>>, vector<2x8x32xf32>,
      %c0_60 = arith.constant 0 : index
      %c0_61 = arith.constant 0 : index
      %c0_62 = arith.constant 0 : index
      %96 = vector.load %arg12[%c0_60, %c0_61, %c0_62] : memref<2x8x32xf32, #tpu.memory_space<vmem>>, vector<2x8x32xf32>
      %c0_63 = arith.constant 0 : index
      %c0_64 = arith.constant 0 : index
      %c0_65 = arith.constant 0 : index
      %97 = vector.load %arg15[%c0_63, %c0_64, %c0_65] : memref<2x8x32xf32, #tpu.memory_space<vmem>>, vector<2x8x32xf32>
      tpu.vector_store %arg15[%c0_63, %c0_64, %c0_65], %96 {strides = array<i32>} : memref<2x8x32xf32, #tpu.memory_space<vmem>>, vector<2x8x32xf32>,
    } else {
    }
    %3 = tpu.iota {dimensions = array<i32: 1>} : vector<8x64xi32>
    %c0 = arith.constant 0 : index
    %c0_1 = arith.constant 0 : index
    %c0_2 = arith.constant 0 : index
    %4 = vector.load %arg1[%c0, %c0_1, %c0_2] : memref<1x8x1xi32, #tpu.memory_space<vmem>>, vector<1x8x1xi32>
    %5 = vector.shape_cast %4 : vector<1x8x1xi32> to vector<8x1xi32>
    %6 = vector.broadcast %5 : vector<8x1xi32> to vector<8x64xi32>
    %7 = arith.cmpi eq, %6, %3 : vector<8x64xi32>
    %8 = arith.extui %7 : vector<8x64xi1> to vector<8x64xi32>
    %9 = arith.sitofp %8 : vector<8x64xi32> to vector<8x64xf32>
    %10 = arith.truncf %9 : vector<8x64xf32> to vector<8x64xbf16>
    %c0_3 = arith.constant 0 : index
    %c0_4 = arith.constant 0 : index
    %11 = vector.load %arg2[%c0_3, %c0_4] : memref<64x32xbf16, #tpu.memory_space<vmem>>, vector<64x32xbf16>
    %cst = arith.constant dense<0.000000e+00> : vector<8x32xf32>
    %12 = tpu.matmul %10, %11, %cst {dimension_numbers = #tpu.dot_dimension_numbers<[1], [0], [0], [1], [0, 0, 1, 1], [], []>} : vector<8x64xbf16>, vector<64x32xbf16>, vector<8x32xf32> -> vector<8x32xf32>
    %c0_5 = arith.constant 0 : index
    %c0_6 = arith.constant 0 : index
    %c0_7 = arith.constant 0 : index
    %13 = vector.load %arg14[%c0_5, %c0_6, %c0_7] : memref<2x8x32xf32, #tpu.memory_space<vmem>>, vector<1x8x32xf32>
    %14 = vector.shape_cast %13 : vector<1x8x32xf32> to vector<8x32xf32>
    %c0_8 = arith.constant 0 : index
    %c0_9 = arith.constant 0 : index
    %c0_10 = arith.constant 0 : index
    %15 = vector.load %arg15[%c0_8, %c0_9, %c0_10] : memref<2x8x32xf32, #tpu.memory_space<vmem>>, vector<1x8x32xf32>
    %16 = vector.shape_cast %15 : vector<1x8x32xf32> to vector<8x32xf32>
    %17 = arith.truncf %12 : vector<8x32xf32> to vector<8x32xbf16>
    %c0_11 = arith.constant 0 : index
    %c0_12 = arith.constant 0 : index
    %18 = vector.load %arg3[%c0_11, %c0_12] : memref<32x128xbf16, #tpu.memory_space<vmem>>, vector<32x128xbf16>
    %cst_13 = arith.constant dense<0.000000e+00> : vector<8x128xf32>
    %19 = tpu.matmul %17, %18, %cst_13 {dimension_numbers = #tpu.dot_dimension_numbers<[1], [0], [0], [1], [0, 0, 1, 1], [], []>} : vector<8x32xbf16>, vector<32x128xbf16>, vector<8x128xf32> -> vector<8x128xf32>
    %20 = arith.truncf %14 : vector<8x32xf32> to vector<8x32xbf16>
    %c0_14 = arith.constant 0 : index
    %c0_15 = arith.constant 0 : index
    %21 = vector.load %arg4[%c0_14, %c0_15] : memref<32x128xbf16, #tpu.memory_space<vmem>>, vector<32x128xbf16>
    %cst_16 = arith.constant dense<0.000000e+00> : vector<8x128xf32>
    %22 = tpu.matmul %20, %21, %cst_16 {dimension_numbers = #tpu.dot_dimension_numbers<[1], [0], [0], [1], [0, 0, 1, 1], [], []>} : vector<8x32xbf16>, vector<32x128xbf16>, vector<8x128xf32> -> vector<8x128xf32>
    %23 = arith.addf %19, %22 : vector<8x128xf32>
    %c0_17 = arith.constant 0 : index
    %c0_18 = arith.constant 0 : index
    %24 = vector.load %arg5[%c0_17, %c0_18] : memref<1x128xf32, #tpu.memory_space<vmem>>, vector<1x128xf32>
    %25 = vector.broadcast %24 : vector<1x128xf32> to vector<8x128xf32>
    %26 = arith.addf %23, %25 : vector<8x128xf32>
    %27 = vector.extract_strided_slice %26 {offsets = [0, 0], sizes = [8, 96], strides = [1, 1]} : vector<8x128xf32> to vector<8x96xf32>
    %28 = arith.negf %27 : vector<8x96xf32>
    %29 = math.exp %28 : vector<8x96xf32>
    %cst_19 = arith.constant 1.000000e+00 : f32
    %30 = vector.broadcast %cst_19 : f32 to vector<8x96xf32>
    %31 = arith.addf %30, %29 : vector<8x96xf32>
    %32 = arith.divf %30, %31 : vector<8x96xf32>
    %33 = vector.extract_strided_slice %32 {offsets = [0, 0], sizes = [8, 32], strides = [1, 1]} : vector<8x96xf32> to vector<8x32xf32>
    %34 = vector.extract_strided_slice %32 {offsets = [0, 32], sizes = [8, 32], strides = [1, 1]} : vector<8x96xf32> to vector<8x32xf32>
    %35 = vector.extract_strided_slice %32 {offsets = [0, 64], sizes = [8, 32], strides = [1, 1]} : vector<8x96xf32> to vector<8x32xf32>
    %36 = vector.extract_strided_slice %26 {offsets = [0, 96], sizes = [8, 32], strides = [1, 1]} : vector<8x128xf32> to vector<8x32xf32>
    %37 = math.tanh %36 : vector<8x32xf32>
    %38 = arith.mulf %34, %16 : vector<8x32xf32>
    %39 = arith.mulf %33, %37 : vector<8x32xf32>
    %40 = arith.addf %38, %39 : vector<8x32xf32>
    %41 = math.tanh %40 : vector<8x32xf32>
    %42 = arith.mulf %35, %41 : vector<8x32xf32>
    %c0_20 = arith.constant 0 : index
    %c0_21 = arith.constant 0 : index
    %c0_22 = arith.constant 0 : index
    %43 = vector.load %arg14[%c0_20, %c0_21, %c0_22] : memref<2x8x32xf32, #tpu.memory_space<vmem>>, vector<1x8x32xf32>
    %44 = vector.shape_cast %43 : vector<1x8x32xf32> to vector<8x32xf32>
    %45 = vector.shape_cast %42 : vector<8x32xf32> to vector<1x8x32xf32>
    tpu.vector_store %arg14[%c0_20, %c0_21, %c0_22], %45 {strides = array<i32>} : memref<2x8x32xf32, #tpu.memory_space<vmem>>, vector<1x8x32xf32>,
    %c0_23 = arith.constant 0 : index
    %c0_24 = arith.constant 0 : index
    %c0_25 = arith.constant 0 : index
    %46 = vector.load %arg15[%c0_23, %c0_24, %c0_25] : memref<2x8x32xf32, #tpu.memory_space<vmem>>, vector<1x8x32xf32>
    %47 = vector.shape_cast %46 : vector<1x8x32xf32> to vector<8x32xf32>
    %48 = vector.shape_cast %40 : vector<8x32xf32> to vector<1x8x32xf32>
    tpu.vector_store %arg15[%c0_23, %c0_24, %c0_25], %48 {strides = array<i32>} : memref<2x8x32xf32, #tpu.memory_space<vmem>>, vector<1x8x32xf32>,
    %c1 = arith.constant 1 : index
    %c0_26 = arith.constant 0 : index
    %c0_27 = arith.constant 0 : index
    %49 = vector.load %arg14[%c1, %c0_26, %c0_27] : memref<2x8x32xf32, #tpu.memory_space<vmem>>, vector<1x8x32xf32>
    %50 = vector.shape_cast %49 : vector<1x8x32xf32> to vector<8x32xf32>
    %c1_28 = arith.constant 1 : index
    %c0_29 = arith.constant 0 : index
    %c0_30 = arith.constant 0 : index
    %51 = vector.load %arg15[%c1_28, %c0_29, %c0_30] : memref<2x8x32xf32, #tpu.memory_space<vmem>>, vector<1x8x32xf32>
    %52 = vector.shape_cast %51 : vector<1x8x32xf32> to vector<8x32xf32>
    %53 = arith.truncf %42 : vector<8x32xf32> to vector<8x32xbf16>
    %c0_31 = arith.constant 0 : index
    %c0_32 = arith.constant 0 : index
    %54 = vector.load %arg6[%c0_31, %c0_32] : memref<32x128xbf16, #tpu.memory_space<vmem>>, vector<32x128xbf16>
    %cst_33 = arith.constant dense<0.000000e+00> : vector<8x128xf32>
    %55 = tpu.matmul %53, %54, %cst_33 {dimension_numbers = #tpu.dot_dimension_numbers<[1], [0], [0], [1], [0, 0, 1, 1], [], []>} : vector<8x32xbf16>, vector<32x128xbf16>, vector<8x128xf32> -> vector<8x128xf32>
    %56 = arith.truncf %50 : vector<8x32xf32> to vector<8x32xbf16>
    %c0_34 = arith.constant 0 : index
    %c0_35 = arith.constant 0 : index
    %57 = vector.load %arg7[%c0_34, %c0_35] : memref<32x128xbf16, #tpu.memory_space<vmem>>, vector<32x128xbf16>
    %cst_36 = arith.constant dense<0.000000e+00> : vector<8x128xf32>
    %58 = tpu.matmul %56, %57, %cst_36 {dimension_numbers = #tpu.dot_dimension_numbers<[1], [0], [0], [1], [0, 0, 1, 1], [], []>} : vector<8x32xbf16>, vector<32x128xbf16>, vector<8x128xf32> -> vector<8x128xf32>
    %59 = arith.addf %55, %58 : vector<8x128xf32>
    %c0_37 = arith.constant 0 : index
    %c0_38 = arith.constant 0 : index
    %60 = vector.load %arg8[%c0_37, %c0_38] : memref<1x128xf32, #tpu.memory_space<vmem>>, vector<1x128xf32>
    %61 = vector.broadcast %60 : vector<1x128xf32> to vector<8x128xf32>
    %62 = arith.addf %59, %61 : vector<8x128xf32>
    %63 = vector.extract_strided_slice %62 {offsets = [0, 0], sizes = [8, 96], strides = [1, 1]} : vector<8x128xf32> to vector<8x96xf32>
    %64 = arith.negf %63 : vector<8x96xf32>
    %65 = math.exp %64 : vector<8x96xf32>
    %cst_39 = arith.constant 1.000000e+00 : f32
    %66 = vector.broadcast %cst_39 : f32 to vector<8x96xf32>
    %67 = arith.addf %66, %65 : vector<8x96xf32>
    %68 = arith.divf %66, %67 : vector<8x96xf32>
    %69 = vector.extract_strided_slice %68 {offsets = [0, 0], sizes = [8, 32], strides = [1, 1]} : vector<8x96xf32> to vector<8x32xf32>
    %70 = vector.extract_strided_slice %68 {offsets = [0, 32], sizes = [8, 32], strides = [1, 1]} : vector<8x96xf32> to vector<8x32xf32>
    %71 = vector.extract_strided_slice %68 {offsets = [0, 64], sizes = [8, 32], strides = [1, 1]} : vector<8x96xf32> to vector<8x32xf32>
    %72 = vector.extract_strided_slice %62 {offsets = [0, 96], sizes = [8, 32], strides = [1, 1]} : vector<8x128xf32> to vector<8x32xf32>
    %73 = math.tanh %72 : vector<8x32xf32>
    %74 = arith.mulf %70, %52 : vector<8x32xf32>
    %75 = arith.mulf %69, %73 : vector<8x32xf32>
    %76 = arith.addf %74, %75 : vector<8x32xf32>
    %77 = math.tanh %76 : vector<8x32xf32>
    %78 = arith.mulf %71, %77 : vector<8x32xf32>
    %c1_40 = arith.constant 1 : index
    %c0_41 = arith.constant 0 : index
    %c0_42 = arith.constant 0 : index
    %79 = vector.load %arg14[%c1_40, %c0_41, %c0_42] : memref<2x8x32xf32, #tpu.memory_space<vmem>>, vector<1x8x32xf32>
    %80 = vector.shape_cast %79 : vector<1x8x32xf32> to vector<8x32xf32>
    %81 = vector.shape_cast %78 : vector<8x32xf32> to vector<1x8x32xf32>
    tpu.vector_store %arg14[%c1_40, %c0_41, %c0_42], %81 {strides = array<i32>} : memref<2x8x32xf32, #tpu.memory_space<vmem>>, vector<1x8x32xf32>,
    %c1_43 = arith.constant 1 : index
    %c0_44 = arith.constant 0 : index
    %c0_45 = arith.constant 0 : index
    %82 = vector.load %arg15[%c1_43, %c0_44, %c0_45] : memref<2x8x32xf32, #tpu.memory_space<vmem>>, vector<1x8x32xf32>
    %83 = vector.shape_cast %82 : vector<1x8x32xf32> to vector<8x32xf32>
    %84 = vector.shape_cast %76 : vector<8x32xf32> to vector<1x8x32xf32>
    tpu.vector_store %arg15[%c1_43, %c0_44, %c0_45], %84 {strides = array<i32>} : memref<2x8x32xf32, #tpu.memory_space<vmem>>, vector<1x8x32xf32>,
    %85 = arith.truncf %78 : vector<8x32xf32> to vector<8x32xbf16>
    %c0_46 = arith.constant 0 : index
    %c0_47 = arith.constant 0 : index
    %86 = vector.load %arg9[%c0_46, %c0_47] : memref<32x128xbf16, #tpu.memory_space<vmem>>, vector<32x128xbf16>
    %cst_48 = arith.constant dense<0.000000e+00> : vector<8x128xf32>
    %87 = tpu.matmul %85, %86, %cst_48 {dimension_numbers = #tpu.dot_dimension_numbers<[1], [0], [0], [1], [0, 0, 1, 1], [], []>} : vector<8x32xbf16>, vector<32x128xbf16>, vector<8x128xf32> -> vector<8x128xf32>
    %c0_49 = arith.constant 0 : index
    %c0_50 = arith.constant 0 : index
    %88 = vector.load %arg10[%c0_49, %c0_50] : memref<1x128xf32, #tpu.memory_space<vmem>>, vector<1x128xf32>
    %89 = vector.broadcast %88 : vector<1x128xf32> to vector<8x128xf32>
    %90 = arith.addf %87, %89 : vector<8x128xf32>
    %c0_51 = arith.constant 0 : index
    %c0_52 = arith.constant 0 : index
    %c0_53 = arith.constant 0 : index
    %91 = vector.load %arg13[%c0_51, %c0_52, %c0_53] : memref<1x8x128xf32, #tpu.memory_space<vmem>>, vector<1x8x128xf32>
    %92 = vector.shape_cast %91 : vector<1x8x128xf32> to vector<8x128xf32>
    %93 = vector.shape_cast %90 : vector<8x128xf32> to vector<1x8x128xf32>
    tpu.vector_store %arg13[%c0_51, %c0_52, %c0_53], %93 {strides = array<i32>} : memref<1x8x128xf32, #tpu.memory_space<vmem>>, vector<1x8x128xf32>,
    return
  }
  func.func @transform_0(%arg0: i32) -> (i32, i32, i32) {
    %c0_i32 = arith.constant 0 : i32
    %c0_i32_0 = arith.constant 0 : i32
    %c0_i32_1 = arith.constant 0 : i32
    return %arg0, %c0_i32, %c0_i32_0 : i32, i32, i32
  }
  func.func @transform_1(%arg0: i32) -> (i32, i32) {
    %c0_i32 = arith.constant 0 : i32
    %c0_i32_0 = arith.constant 0 : i32
    %c0_i32_1 = arith.constant 0 : i32
    return %c0_i32, %c0_i32_0 : i32, i32
  }
  func.func @transform_2(%arg0: i32) -> (i32, i32) {
    %c0_i32 = arith.constant 0 : i32
    %c0_i32_0 = arith.constant 0 : i32
    %c0_i32_1 = arith.constant 0 : i32
    return %c0_i32, %c0_i32_0 : i32, i32
  }
  func.func @transform_3(%arg0: i32) -> (i32, i32) {
    %c0_i32 = arith.constant 0 : i32
    %c0_i32_0 = arith.constant 0 : i32
    %c0_i32_1 = arith.constant 0 : i32
    return %c0_i32, %c0_i32_0 : i32, i32
  }
  func.func @transform_4(%arg0: i32) -> (i32, i32) {
    %c0_i32 = arith.constant 0 : i32
    %c0_i32_0 = arith.constant 0 : i32
    %c0_i32_1 = arith.constant 0 : i32
    return %c0_i32, %c0_i32_0 : i32, i32
  }
  func.func @transform_5(%arg0: i32) -> (i32, i32) {
    %c0_i32 = arith.constant 0 : i32
    %c0_i32_0 = arith.constant 0 : i32
    %c0_i32_1 = arith.constant 0 : i32
    return %c0_i32, %c0_i32_0 : i32, i32
  }
  func.func @transform_6(%arg0: i32) -> (i32, i32) {
    %c0_i32 = arith.constant 0 : i32
    %c0_i32_0 = arith.constant 0 : i32
    %c0_i32_1 = arith.constant 0 : i32
    return %c0_i32, %c0_i32_0 : i32, i32
  }
  func.func @transform_7(%arg0: i32) -> (i32, i32) {
    %c0_i32 = arith.constant 0 : i32
    %c0_i32_0 = arith.constant 0 : i32
    %c0_i32_1 = arith.constant 0 : i32
    return %c0_i32, %c0_i32_0 : i32, i32
  }
  func.func @transform_8(%arg0: i32) -> (i32, i32) {
    %c0_i32 = arith.constant 0 : i32
    %c0_i32_0 = arith.constant 0 : i32
    %c0_i32_1 = arith.constant 0 : i32
    return %c0_i32, %c0_i32_0 : i32, i32
  }
  func.func @transform_9(%arg0: i32) -> (i32, i32) {
    %c0_i32 = arith.constant 0 : i32
    %c0_i32_0 = arith.constant 0 : i32
    %c0_i32_1 = arith.constant 0 : i32
    return %c0_i32, %c0_i32_0 : i32, i32
  }
  func.func @transform_10(%arg0: i32) -> (i32, i32, i32) {
    %c0_i32 = arith.constant 0 : i32
    %c0_i32_0 = arith.constant 0 : i32
    %c0_i32_1 = arith.constant 0 : i32
    %c0_i32_2 = arith.constant 0 : i32
    return %c0_i32, %c0_i32_0, %c0_i32_1 : i32, i32, i32
  }
  func.func @transform_11(%arg0: i32) -> (i32, i32, i32) {
    %c0_i32 = arith.constant 0 : i32
    %c0_i32_0 = arith.constant 0 : i32
    %c0_i32_1 = arith.constant 0 : i32
    %c0_i32_2 = arith.constant 0 : i32
    return %c0_i32, %c0_i32_0, %c0_i32_1 : i32, i32, i32
  }
  func.func @transform_12(%arg0: i32) -> (i32, i32, i32) {
    %c0_i32 = arith.constant 0 : i32
    %c0_i32_0 = arith.constant 0 : i32
    %c0_i32_1 = arith.constant 0 : i32
    return %arg0, %c0_i32, %c0_i32_0 : i32, i32, i32
  }
  func.func @transform_13(%arg0: i32) -> (i32, i32, i32) {
    %c0_i32 = arith.constant 0 : i32
    %c0_i32_0 = arith.constant 0 : i32
    %c0_i32_1 = arith.constant 0 : i32
    %c0_i32_2 = arith.constant 0 : i32
    return %c0_i32, %c0_i32_0, %c0_i32_1 : i32, i32, i32
  }
  func.func @transform_14(%arg0: i32) -> (i32, i32, i32) {
    %c0_i32 = arith.constant 0 : i32
    %c0_i32_0 = arith.constant 0 : i32
    %c0_i32_1 = arith.constant 0 : i32
    %c0_i32_2 = arith.constant 0 : i32
    return %c0_i32, %c0_i32_0, %c0_i32_1 : i32, i32, i32
  }
}

</mosaic_0001>

<llo_original>
// kernel: decoder_decode.1
$region0: #{decoder_decode.1}
  #allocation0 [shape = 'u32[]', space=smem, size = 0x4, offset = 0x4, fixed_abs, tag = 'smem constant byte address 0x4 - core index']
  #allocation1 [shape = 'u32[72,128]{1,0:T(1,128)}', space=vmem, size = 0x9000, scoped, tag = 'internal scratch']
  %s0 = inlined_call_operand.vmem [shape: s32[8,8,1], index: 0, kind: input, shape index: {}]
  %s1 = inlined_call_operand.vmem [shape: bf16[64,32], index: 1, kind: input, shape index: {}]
  %s2 = inlined_call_operand.vmem [shape: bf16[32,128], index: 2, kind: input, shape index: {}]
  %s3 = inlined_call_operand.vmem [shape: bf16[32,128], index: 3, kind: input, shape index: {}]
  %s4 = inlined_call_operand.vmem [shape: f32[1,128], index: 4, kind: input, shape index: {}]
  %s5 = inlined_call_operand.vmem [shape: bf16[32,128], index: 5, kind: input, shape index: {}]
  %s6 = inlined_call_operand.vmem [shape: bf16[32,128], index: 6, kind: input, shape index: {}]
  %s7 = inlined_call_operand.vmem [shape: f32[1,128], index: 7, kind: input, shape index: {}]
  %s8 = inlined_call_operand.vmem [shape: bf16[32,128], index: 8, kind: input, shape index: {}]
  %s9 = inlined_call_operand.vmem [shape: f32[1,128], index: 9, kind: input, shape index: {}]
  %s10 = inlined_call_operand.vmem [shape: f32[2,8,32], index: 10, kind: input, shape index: {}]
  %s11 = inlined_call_operand.vmem [shape: f32[2,8,32], index: 11, kind: input, shape index: {}]
  %s12 = inlined_call_operand.hbm [shape: f32[8,8,128], index: 12, kind: output, shape index: {0}]
  %s13 = inlined_call_operand.hbm [shape: f32[2,8,32], index: 13, kind: output, shape index: {1}]
  %s14 = inlined_call_operand.hbm [shape: f32[2,8,32], index: 14, kind: output, shape index: {2}]
  %15 = xla_tuple %s12, %s13, %s14
  %s16 = sld [smem:[#allocation0]]
  $region101: #{decoder_decode.1} parent=0
    _
  %s18 = ssub.s32 1, %s16
  %s19 = scalar_select 0, %s18, %s16
  $region1: #{decoder_decode.1} parent=0
    #allocation2 [shape = 'u8[8192]{0}', space=vmem, size = 0x2000, scoped, tag = 'output window, operand 0']
    #allocation3 [shape = 's32[2]{0}', space=sflag, size = 0x8, scoped, tag = 'scoped memory for decoder_decode.1']
    #allocation4 [shape = 'u8[8192]{0}', space=vmem, size = 0x2000, scoped, tag = 'output window, operand 1, single buffered']
    #allocation5 [shape = 's32[1]{0}', space=sflag, size = 0x4, scoped, tag = 'scoped memory for decoder_decode.1']
    #allocation6 [shape = 'u8[8192]{0}', space=vmem, size = 0x2000, scoped, tag = 'output window, operand 2, single buffered']
    %20 = vsyncpa [#allocation3], 0
    %s21 = scalar_lea.sflag [#allocation3], 1
    %22 = vsyncpa %s21, 0
    %23 = vsyncpa [#allocation5], 0
    loop: start=0, step=1, limit=10
    $region2: #{decoder_decode.1} parent=1 // loop_pre_header
      _
    $region3: #{decoder_decode.1} parent=1 // loop_header
      %s25 = sphi 0, %s29
      %p26 = scmp.ge.s32.totalorder %s25, 10
      %s35 = sphi 0, %s37
      %s38 = sphi 0, %s35
      %s39 = sphi 0, %s38
      %s55 = sphi 0, %s39
      %s59 = sphi 0, %s59
      %s61 = sphi 0, %s59
      %s62 = sphi 0, %s61
      %s76 = sphi 0, %s62
      %s80 = sphi 0, %s80
      %s82 = sphi 0, %s80
      %s83 = sphi 0, %s82
      %s97 = sphi 0, %s83
      %s101 = sphi 0, %s101
      %s103 = sphi 0, %s101
      %s104 = sphi 0, %s103
      %s118 = sphi 0, %s104
      %s122 = sphi 0, %s122
      %s124 = sphi 0, %s122
      %s125 = sphi 0, %s124
      %s139 = sphi 0, %s125
      %s143 = sphi 0, %s143
      %s145 = sphi 0, %s143
      %s146 = sphi 0, %s145
      %s160 = sphi 0, %s146
      %s164 = sphi 0, %s164
      %s166 = sphi 0, %s164
      %s167 = sphi 0, %s166
      %s181 = sphi 0, %s167
      %s185 = sphi 0, %s185
      %s187 = sphi 0, %s185
      %s188 = sphi 0, %s187
      %s202 = sphi 0, %s188
      %s206 = sphi 0, %s206
      %s208 = sphi 0, %s206
      %s209 = sphi 0, %s208
      %s223 = sphi 0, %s209
      %s227 = sphi 0, %s227
      %s229 = sphi 0, %s227
      %s230 = sphi 0, %s229
      %s244 = sphi 0, %s230
      %s248 = sphi 0, %s248
      %s250 = sphi 0, %s248
      %s251 = sphi 0, %s250
      %s265 = sphi 0, %s251
      %s269 = sphi 0, %s269
      %s271 = sphi 0, %s269
      %s272 = sphi 0, %s271
      %s286 = sphi 0, %s272
      %s292 = sphi 0, %s294
      %s295 = sphi 0, %s292
      %s296 = sphi 0, %s295
      %s312 = sphi 0, %s296
      %s316 = sphi 0, %s316
      %s318 = sphi 0, %s316
      %s319 = sphi 0, %s318
      %s333 = sphi 0, %s319
      %s337 = sphi 0, %s337
      %s339 = sphi 0, %s337
      %s340 = sphi 0, %s339
      %s354 = sphi 0, %s340
    $region4: #{decoder_decode.1} parent=1 // loop_header_branch
      %28 = sbr.rel (%p26) target = $region8
    $region5: #{decoder_decode.1} parent=1 // loop_body
      %s30 = ssub.s32 %s25, 1
      %s31 = ssub.s32 %s25, 2
      %s32 = sadd.s32 %s25, 1
      %s33 = ssub.s32 %s25, %s32
      %p34 = scmp.eq.s32.totalorder %s33, 0
      %s36 = sadd.s32 %s35, 1
      %s37 = scalar_select %p34, %s35, %s36
      %p40 = pneg %p34
      %p41 = scmp.eq.s32.totalorder %s25, 7
      %p42 = por %p40, %p41
      %p43 = scmp.ne.s32.totalorder %s35, %s38
      %p44 = scmp.eq.s32.totalorder %s25, 0
      %p45 = por %p43, %p44
      %p46 = scmp.ne.s32.totalorder %s35, %s38
      %p47 = scmp.eq.s32.totalorder %s30, 7
      %p48 = por %p46, %p47
      %p49 = scmp.ne.s32.totalorder %s38, %s39
      %p50 = scmp.eq.s32.totalorder %s30, 0
      %p51 = por %p49, %p50
      %p52 = scmp.ne.s32.totalorder %s38, %s39
      %p53 = scmp.eq.s32.totalorder %s31, 7
      %p54 = por %p52, %p53
      %p56 = scmp.ne.s32.totalorder %s39, %s55
      %p57 = scmp.eq.s32.totalorder %s31, 0
      %p58 = por %p56, %p57
      %s60 = sadd.s32 %s59, 1
      %p63 = scmp.eq.s32.totalorder %s25, 7
      %p64 = scmp.ne.s32.totalorder %s59, %s61
      %p65 = scmp.eq.s32.totalorder %s25, 0
      %p66 = por %p64, %p65
      %p67 = scmp.ne.s32.totalorder %s59, %s61
      %p68 = scmp.eq.s32.totalorder %s30, 7
      %p69 = por %p67, %p68
      %p70 = scmp.ne.s32.totalorder %s61, %s62
      %p71 = scmp.eq.s32.totalorder %s30, 0
      %p72 = por %p70, %p71
      %p73 = scmp.ne.s32.totalorder %s61, %s62
      %p74 = scmp.eq.s32.totalorder %s31, 7
      %p75 = por %p73, %p74
      %p77 = scmp.ne.s32.totalorder %s62, %s76
      %p78 = scmp.eq.s32.totalorder %s31, 0
      %p79 = por %p77, %p78
      %s81 = sadd.s32 %s80, 1
      %p84 = scmp.eq.s32.totalorder %s25, 7
      %p85 = scmp.ne.s32.totalorder %s80, %s82
      %p86 = scmp.eq.s32.totalorder %s25, 0
      %p87 = por %p85, %p86
      %p88 = scmp.ne.s32.totalorder %s80, %s82
      %p89 = scmp.eq.s32.totalorder %s30, 7
      %p90 = por %p88, %p89
      %p91 = scmp.ne.s32.totalorder %s82, %s83
      %p92 = scmp.eq.s32.totalorder %s30, 0
      %p93 = por %p91, %p92
      %p94 = scmp.ne.s32.totalorder %s82, %s83
      %p95 = scmp.eq.s32.totalorder %s31, 7
      %p96 = por %p94, %p95
      %p98 = scmp.ne.s32.totalorder %s83, %s97
      %p99 = scmp.eq.s32.totalorder %s31, 0
      %p100 = por %p98, %p99
      %s102 = sadd.s32 %s101, 1
      %p105 = scmp.eq.s32.totalorder %s25, 7
      %p106 = scmp.ne.s32.totalorder %s101, %s103
      %p107 = scmp.eq.s32.totalorder %s25, 0
      %p108 = por %p106, %p107
      %p109 = scmp.ne.s32.totalorder %s101, %s103
      %p110 = scmp.eq.s32.totalorder %s30, 7
      %p111 = por %p109, %p110
      %p112 = scmp.ne.s32.totalorder %s103, %s104
      %p113 = scmp.eq.s32.totalorder %s30, 0
      %p114 = por %p112, %p113
      %p115 = scmp.ne.s32.totalorder %s103, %s104
      %p116 = scmp.eq.s32.totalorder %s31, 7
      %p117 = por %p115, %p116
      %p119 = scmp.ne.s32.totalorder %s104, %s118
      %p120 = scmp.eq.s32.totalorder %s31, 0
      %p121 = por %p119, %p120
      %s123 = sadd.s32 %s122, 1
      %p126 = scmp.eq.s32.totalorder %s25, 7
      %p127 = scmp.ne.s32.totalorder %s122, %s124
      %p128 = scmp.eq.s32.totalorder %s25, 0
      %p129 = por %p127, %p128
      %p130 = scmp.ne.s32.totalorder %s122, %s124
      %p131 = scmp.eq.s32.totalorder %s30, 7
      %p132 = por %p130, %p131
      %p133 = scmp.ne.s32.totalorder %s124, %s125
      %p134 = scmp.eq.s32.totalorder %s30, 0
      %p135 = por %p133, %p134
      %p136 = scmp.ne.s32.totalorder %s124, %s125
      %p137 = scmp.eq.s32.totalorder %s31, 7
      %p138 = por %p136, %p137
      %p140 = scmp.ne.s32.totalorder %s125, %s139
      %p141 = scmp.eq.s32.totalorder %s31, 0
      %p142 = por %p140, %p141
      %s144 = sadd.s32 %s143, 1
      %p147 = scmp.eq.s32.totalorder %s25, 7
      %p148 = scmp.ne.s32.totalorder %s143, %s145
      %p149 = scmp.eq.s32.totalorder %s25, 0
      %p150 = por %p148, %p149
      %p151 = scmp.ne.s32.totalorder %s143, %s145
      %p152 = scmp.eq.s32.totalorder %s30, 7
      %p153 = por %p151, %p152
      %p154 = scmp.ne.s32.totalorder %s145, %s146
      %p155 = scmp.eq.s32.totalorder %s30, 0
      %p156 = por %p154, %p155
      %p157 = scmp.ne.s32.totalorder %s145, %s146
      %p158 = scmp.eq.s32.totalorder %s31, 7
      %p159 = por %p157, %p158
      %p161 = scmp.ne.s32.totalorder %s146, %s160
      %p162 = scmp.eq.s32.totalorder %s31, 0
      %p163 = por %p161, %p162
      %s165 = sadd.s32 %s164, 1
      %p168 = scmp.eq.s32.totalorder %s25, 7
      %p169 = scmp.ne.s32.totalorder %s164, %s166
      %p170 = scmp.eq.s32.totalorder %s25, 0
      %p171 = por %p169, %p170
      %p172 = scmp.ne.s32.totalorder %s164, %s166
      %p173 = scmp.eq.s32.totalorder %s30, 7
      %p174 = por %p172, %p173
      %p175 = scmp.ne.s32.totalorder %s166, %s167
      %p176 = scmp.eq.s32.totalorder %s30, 0
      %p177 = por %p175, %p176
      %p178 = scmp.ne.s32.totalorder %s166, %s167
      %p179 = scmp.eq.s32.totalorder %s31, 7
      %p180 = por %p178, %p179
      %p182 = scmp.ne.s32.totalorder %s167, %s181
      %p183 = scmp.eq.s32.totalorder %s31, 0
      %p184 = por %p182, %p183
      %s186 = sadd.s32 %s185, 1
      %p189 = scmp.eq.s32.totalorder %s25, 7
      %p190 = scmp.ne.s32.totalorder %s185, %s187
      %p191 = scmp.eq.s32.totalorder %s25, 0
      %p192 = por %p190, %p191
      %p193 = scmp.ne.s32.totalorder %s185, %s187
      %p194 = scmp.eq.s32.totalorder %s30, 7
      %p195 = por %p193, %p194
      %p196 = scmp.ne.s32.totalorder %s187, %s188
      %p197 = scmp.eq.s32.totalorder %s30, 0
      %p198 = por %p196, %p197
      %p199 = scmp.ne.s32.totalorder %s187, %s188
      %p200 = scmp.eq.s32.totalorder %s31, 7
      %p201 = por %p199, %p200
      %p203 = scmp.ne.s32.totalorder %s188, %s202
      %p204 = scmp.eq.s32.totalorder %s31, 0
      %p205 = por %p203, %p204
      %s207 = sadd.s32 %s206, 1
      %p210 = scmp.eq.s32.totalorder %s25, 7
      %p211 = scmp.ne.s32.totalorder %s206, %s208
      %p212 = scmp.eq.s32.totalorder %s25, 0
      %p213 = por %p211, %p212
      %p214 = scmp.ne.s32.totalorder %s206, %s208
      %p215 = scmp.eq.s32.totalorder %s30, 7
      %p216 = por %p214, %p215
      %p217 = scmp.ne.s32.totalorder %s208, %s209
      %p218 = scmp.eq.s32.totalorder %s30, 0
      %p219 = por %p217, %p218
      %p220 = scmp.ne.s32.totalorder %s208, %s209
      %p221 = scmp.eq.s32.totalorder %s31, 7
      %p222 = por %p220, %p221
      %p224 = scmp.ne.s32.totalorder %s209, %s223
      %p225 = scmp.eq.s32.totalorder %s31, 0
      %p226 = por %p224, %p225
      %s228 = sadd.s32 %s227, 1
      %p231 = scmp.eq.s32.totalorder %s25, 7
      %p232 = scmp.ne.s32.totalorder %s227, %s229
      %p233 = scmp.eq.s32.totalorder %s25, 0
      %p234 = por %p232, %p233
      %p235 = scmp.ne.s32.totalorder %s227, %s229
      %p236 = scmp.eq.s32.totalorder %s30, 7
      %p237 = por %p235, %p236
      %p238 = scmp.ne.s32.totalorder %s229, %s230
      %p239 = scmp.eq.s32.totalorder %s30, 0
      %p240 = por %p238, %p239
      %p241 = scmp.ne.s32.totalorder %s229, %s230
      %p242 = scmp.eq.s32.totalorder %s31, 7
      %p243 = por %p241, %p242
      %p245 = scmp.ne.s32.totalorder %s230, %s244
      %p246 = scmp.eq.s32.totalorder %s31, 0
      %p247 = por %p245, %p246
      %s249 = sadd.s32 %s248, 1
      %p252 = scmp.eq.s32.totalorder %s25, 7
      %p253 = scmp.ne.s32.totalorder %s248, %s250
      %p254 = scmp.eq.s32.totalorder %s25, 0
      %p255 = por %p253, %p254
      %p256 = scmp.ne.s32.totalorder %s248, %s250
      %p257 = scmp.eq.s32.totalorder %s30, 7
      %p258 = por %p256, %p257
      %p259 = scmp.ne.s32.totalorder %s250, %s251
      %p260 = scmp.eq.s32.totalorder %s30, 0
      %p261 = por %p259, %p260
      %p262 = scmp.ne.s32.totalorder %s250, %s251
      %p263 = scmp.eq.s32.totalorder %s31, 7
      %p264 = por %p262, %p263
      %p266 = scmp.ne.s32.totalorder %s251, %s265
      %p267 = scmp.eq.s32.totalorder %s31, 0
      %p268 = por %p266, %p267
      %s270 = sadd.s32 %s269, 1
      %p273 = scmp.eq.s32.totalorder %s25, 7
      %p274 = scmp.ne.s32.totalorder %s269, %s271
      %p275 = scmp.eq.s32.totalorder %s25, 0
      %p276 = por %p274, %p275
      %p277 = scmp.ne.s32.totalorder %s269, %s271
      %p278 = scmp.eq.s32.totalorder %s30, 7
      %p279 = por %p277, %p278
      %p280 = scmp.ne.s32.totalorder %s271, %s272
      %p281 = scmp.eq.s32.totalorder %s30, 0
      %p282 = por %p280, %p281
      %p283 = scmp.ne.s32.totalorder %s271, %s272
      %p284 = scmp.eq.s32.totalorder %s31, 7
      %p285 = por %p283, %p284
      %p287 = scmp.ne.s32.totalorder %s272, %s286
      %p288 = scmp.eq.s32.totalorder %s31, 0
      %p289 = por %p287, %p288
      %s290 = ssub.s32 %s25, %s32
      %p291 = scmp.eq.s32.totalorder %s290, 0
      %s293 = sadd.s32 %s292, 1
      %s294 = scalar_select %p291, %s292, %s293
      %p297 = pneg %p291
      %p298 = scmp.eq.s32.totalorder %s25, 7
      %p299 = por %p297, %p298
      %p300 = scmp.ne.s32.totalorder %s292, %s295
      %p301 = scmp.eq.s32.totalorder %s25, 0
      %p302 = por %p300, %p301
      %p303 = scmp.ne.s32.totalorder %s292, %s295
      %p304 = scmp.eq.s32.totalorder %s30, 7
      %p305 = por %p303, %p304
      %p306 = scmp.ne.s32.totalorder %s295, %s296
      %p307 = scmp.eq.s32.totalorder %s30, 0
      %p308 = por %p306, %p307
      %p309 = scmp.ne.s32.totalorder %s295, %s296
      %p310 = scmp.eq.s32.totalorder %s31, 7
      %p311 = por %p309, %p310
      %p313 = scmp.ne.s32.totalorder %s296, %s312
      %p314 = scmp.eq.s32.totalorder %s31, 0
      %p315 = por %p313, %p314
      %s317 = sadd.s32 %s316, 1
      %p320 = scmp.eq.s32.totalorder %s25, 7
      %p321 = scmp.ne.s32.totalorder %s316, %s318
      %p322 = scmp.eq.s32.totalorder %s25, 0
      %p323 = por %p321, %p322
      %p324 = scmp.ne.s32.totalorder %s316, %s318
      %p325 = scmp.eq.s32.totalorder %s30, 7
      %p326 = por %p324, %p325
      %p327 = scmp.ne.s32.totalorder %s318, %s319
      %p328 = scmp.eq.s32.totalorder %s30, 0
      %p329 = por %p327, %p328
      %p330 = scmp.ne.s32.totalorder %s318, %s319
      %p331 = scmp.eq.s32.totalorder %s31, 7
      %p332 = por %p330, %p331
      %p334 = scmp.ne.s32.totalorder %s319, %s333
      %p335 = scmp.eq.s32.totalorder %s31, 0
      %p336 = por %p334, %p335
      %s338 = sadd.s32 %s337, 1
      %p341 = scmp.eq.s32.totalorder %s25, 7
      %p342 = scmp.ne.s32.totalorder %s337, %s339
      %p343 = scmp.eq.s32.totalorder %s25, 0
      %p344 = por %p342, %p343
      %p345 = scmp.ne.s32.totalorder %s337, %s339
      %p346 = scmp.eq.s32.totalorder %s30, 7
      %p347 = por %p345, %p346
      %p348 = scmp.ne.s32.totalorder %s339, %s340
      %p349 = scmp.eq.s32.totalorder %s30, 0
      %p350 = por %p348, %p349
      %p351 = scmp.ne.s32.totalorder %s339, %s340
      %p352 = scmp.eq.s32.totalorder %s31, 7
      %p353 = por %p351, %p352
      %p355 = scmp.ne.s32.totalorder %s340, %s354
      %p356 = scmp.eq.s32.totalorder %s31, 0
      %p357 = por %p355, %p356
      %p358 = scmp.le.s32.totalorder 1, %s25
      %p359 = scmp.lt.s32.totalorder %s25, 9
      %p360 = pnand %p358, %p359
      %p361 = pneg %p360
      // Predicated region
      $region9: #{decoder_decode.1} parent=5 // pred_check
        _
      $region10: #{decoder_decode.1} parent=5 // pred_check_branch
        %363 = sbr.rel (%p360) target = $region12
      $region11: #{decoder_decode.1} parent=5 // pred_region
        %s364 = ssub.s32 %s25, 1
        // Predicated region
        $region13: #{decoder_decode.1} parent=11 // pred_check
          %p365 = pneg %p72
        $region14: #{decoder_decode.1} parent=11 // pred_check_branch
          %367 = sbr.rel (%p365) target = $region16
        $region15: #{decoder_decode.1} parent=11 // pred_region
          _
        $region16: #{decoder_decode.1} parent=11 // pred_fallthru
          _
        // Predicated region
        $region17: #{decoder_decode.1} parent=11 // pred_check
          %p368 = pneg %p93
        $region18: #{decoder_decode.1} parent=11 // pred_check_branch
          %370 = sbr.rel (%p368) target = $region20
        $region19: #{decoder_decode.1} parent=11 // pred_region
          _
        $region20: #{decoder_decode.1} parent=11 // pred_fallthru
          _
        // Predicated region
        $region21: #{decoder_decode.1} parent=11 // pred_check
          %p371 = pneg %p114
        $region22: #{decoder_decode.1} parent=11 // pred_check_branch
          %373 = sbr.rel (%p371) target = $region24
        $region23: #{decoder_decode.1} parent=11 // pred_region
          _
        $region24: #{decoder_decode.1} parent=11 // pred_fallthru
          _
        // Predicated region
        $region25: #{decoder_decode.1} parent=11 // pred_check
          %p374 = pneg %p135
        $region26: #{decoder_decode.1} parent=11 // pred_check_branch
          %376 = sbr.rel (%p374) target = $region28
        $region27: #{decoder_decode.1} parent=11 // pred_region
          _
        $region28: #{decoder_decode.1} parent=11 // pred_fallthru
          _
        // Predicated region
        $region29: #{decoder_decode.1} parent=11 // pred_check
          %p377 = pneg %p156
        $region30: #{decoder_decode.1} parent=11 // pred_check_branch
          %379 = sbr.rel (%p377) target = $region32
        $region31: #{decoder_decode.1} parent=11 // pred_region
          _
        $region32: #{decoder_decode.1} parent=11 // pred_fallthru
          _
        // Predicated region
        $region33: #{decoder_decode.1} parent=11 // pred_check
          %p380 = pneg %p177
        $region34: #{decoder_decode.1} parent=11 // pred_check_branch
          %382 = sbr.rel (%p380) target = $region36
        $region35: #{decoder_decode.1} parent=11 // pred_region
          _
        $region36: #{decoder_decode.1} parent=11 // pred_fallthru
          _
        // Predicated region
        $region37: #{decoder_decode.1} parent=11 // pred_check
          %p383 = pneg %p198
        $region38: #{decoder_decode.1} parent=11 // pred_check_branch
          %385 = sbr.rel (%p383) target = $region40
        $region39: #{decoder_decode.1} parent=11 // pred_region
          _
        $region40: #{decoder_decode.1} parent=11 // pred_fallthru
          _
        // Predicated region
        $region41: #{decoder_decode.1} parent=11 // pred_check
          %p386 = pneg %p219
        $region42: #{decoder_decode.1} parent=11 // pred_check_branch
          %388 = sbr.rel (%p386) target = $region44
        $region43: #{decoder_decode.1} parent=11 // pred_region
          _
        $region44: #{decoder_decode.1} parent=11 // pred_fallthru
          _
        // Predicated region
        $region45: #{decoder_decode.1} parent=11 // pred_check
          %p389 = pneg %p240
        $region46: #{decoder_decode.1} parent=11 // pred_check_branch
          %391 = sbr.rel (%p389) target = $region48
        $region47: #{decoder_decode.1} parent=11 // pred_region
          _
        $region48: #{decoder_decode.1} parent=11 // pred_fallthru
          _
        // Predicated region
        $region49: #{decoder_decode.1} parent=11 // pred_check
          %p392 = pneg %p261
        $region50: #{decoder_decode.1} parent=11 // pred_check_branch
          %394 = sbr.rel (%p392) target = $region52
        $region51: #{decoder_decode.1} parent=11 // pred_region
          _
        $region52: #{decoder_decode.1} parent=11 // pred_fallthru
          _
        // Predicated region
        $region53: #{decoder_decode.1} parent=11 // pred_check
          %p395 = pneg %p282
        $region54: #{decoder_decode.1} parent=11 // pred_check_branch
          %397 = sbr.rel (%p395) target = $region56
        $region55: #{decoder_decode.1} parent=11 // pred_region
          _
        $region56: #{decoder_decode.1} parent=11 // pred_fallthru
          _
      $region12: #{decoder_decode.1} parent=5 // pred_fallthru
        _
      %p398 = scmp.lt.s32.totalorder %s25, 8
      // Predicated region
      $region57: #{decoder_decode.1} parent=5 // pred_check
        %p399 = pneg %p398
      $region58: #{decoder_decode.1} parent=5 // pred_check_branch
        %401 = sbr.rel (%p399) target = $region60
      $region59: #{decoder_decode.1} parent=5 // pred_region
        // Predicated region
        $region61: #{decoder_decode.1} parent=59 // pred_check
          %p402 = pneg %p45
        $region62: #{decoder_decode.1} parent=59 // pred_check_branch
          %404 = sbr.rel (%p402) target = $region64
        $region63: #{decoder_decode.1} parent=59 // pred_region
          %p405 = scmp.lt.s32.totalorder %s25, 7
          %s406 = scalar_select %p405, %s25, 7
          %s407 = smul.addr %s406, 8
          %s408 = scalar_lea.vmem %s0, %s407
        $region64: #{decoder_decode.1} parent=59 // pred_fallthru
          _
      $region60: #{decoder_decode.1} parent=5 // pred_fallthru
        _
      %p409 = scmp.le.s32.totalorder 1, %s25
      %p410 = scmp.lt.s32.totalorder %s25, 9
      %p411 = pnand %p409, %p410
      %p412 = pneg %p411
      // Predicated region
      $region65: #{decoder_decode.1} parent=5 // pred_check
        _
      $region66: #{decoder_decode.1} parent=5 // pred_check_branch
        %414 = sbr.rel (%p411) target = $region68
      $region67: #{decoder_decode.1} parent=5 // pred_region
        %s415 = ssub.s32 %s25, 1
        %p416 = scmp.lt.s32.totalorder %s30, 7
        %s417 = scalar_select %p416, %s30, 7
        %s418 = smul.addr %s417, 8
        %s419 = scalar_lea.vmem %s0, %s418
        %p420 = pneg %p51
        %p421 = pneg %p48
        %p422 = pneg %p72
        %p423 = pneg %p69
        %p424 = pneg %p93
        %p425 = pneg %p90
        %p426 = pneg %p114
        %p427 = pneg %p111
        %p428 = pneg %p135
        %p429 = pneg %p132
        %p430 = pneg %p156
        %p431 = pneg %p153
        %p432 = pneg %p177
        %p433 = pneg %p174
        %p434 = pneg %p198
        %p435 = pneg %p195
        %p436 = pneg %p219
        %p437 = pneg %p216
        %p438 = pneg %p240
        %p439 = pneg %p237
        %p440 = pneg %p261
        %p441 = pneg %p258
        %p442 = pneg %p282
        %p443 = pneg %p279
        %p444 = pneg %p308
        %p445 = pneg %p305
        %s446 = sand.u32 %s295, 1
        %s447 = scalar_lea.sflag [#allocation3], %s446
        %s448 = sand.u32 %s295, 1
        %s449 = smul.addr %s448, 8
        %s450 = scalar_lea.vmem [#allocation2], %s449
        %p451 = pneg %p329
        %p452 = pneg %p326
        %p453 = pneg %p350
        %p454 = pneg %p347
        %p455 = scmp.lt.s32.totalorder %s30, 7
        %s456 = scalar_select %p455, %s30, 7
        %s457 = smul.addr %s456, 8
        %s458 = scalar_lea.vmem %s0, %s457
        %p460 = scmp.eq.s32.totalorder %s30, 0
        // Predicated region
        $region69: #{decoder_decode.1} parent=67 // pred_check
          %p461 = pneg %p460
        $region70: #{decoder_decode.1} parent=67 // pred_check_branch
          %463 = sbr.rel (%p461) target = $region72
        $region71: #{decoder_decode.1} parent=67 // pred_region
          %v464 = vld [vmem:[%s10] sm:$0xff]
          %v465 = vld [vmem:[%s10 + $0x8] sm:$0xff]
          %vm466 = vcmask 261120
          %467 = vst.msk [vmem:[#allocation4] sm:$0xff] %vm466, %v464
          %468 = vst.msk [vmem:[#allocation4 + $0x8] sm:$0xff] %vm466, %v465
          %v469 = vld [vmem:[%s11] sm:$0xff]
          %v470 = vld [vmem:[%s11 + $0x8] sm:$0xff]
          %471 = vst.msk [vmem:[#allocation6] sm:$0xff] %vm466, %v469
          %472 = vst.msk [vmem:[#allocation6 + $0x8] sm:$0xff] %vm466, %v470
        $region72: #{decoder_decode.1} parent=67 // pred_fallthru
          _
        %v473 = vlaneseq
        %v474 = vand.u32 %v473, 127
        %v475 = vld [vmem:[%s458] sm:$0xff]
        %476 = vset.pattern.permute.xlu0 0
        %477 = vperm.xlu0 %476, %v475
        %v478 = vpop.permute.xlu0 %477
        %vm479 = vcmp.eq.s32.totalorder %v478, %v474
        %v480 = vsel %vm479, 1, 0
        %v481 = vcvt.s32.f32 %v480
        %v482 = vpack.c.bf16 %v481, %v481
        %v483 = vld [vmem:[%s1] sm:$0xf]
        %v484 = vld [vmem:[%s1 + $0x4] sm:$0xf]
        %v485 = vld [vmem:[%s1 + $0x8] sm:$0xf]
        %v486 = vld [vmem:[%s1 + $0xc] sm:$0xf]
        %v487 = vld [vmem:[%s1 + $0x10] sm:$0xf]
        %v488 = vld [vmem:[%s1 + $0x14] sm:$0xf]
        %v489 = vld [vmem:[%s1 + $0x18] sm:$0xf]
        %v490 = vld [vmem:[%s1 + $0x1c] sm:$0xf]
        %v499 = vunpack.c.l.b16 %v483
        %v500 = vunpack.c.l.b16 %v484
        %v501 = vunpack.c.l.b16 %v485
        %v502 = vunpack.c.l.b16 %v486
        %v503 = vunpack.c.l.b16 %v487
        %v504 = vunpack.c.l.b16 %v488
        %v505 = vunpack.c.l.b16 %v489
        %v506 = vunpack.c.l.b16 %v490
        %v507 = vpack.c.b16 %v500, %v499
        %v508 = vpack.c.b16 %v502, %v501
        %v509 = vpack.c.b16 %v504, %v503
        %v510 = vpack.c.b16 %v506, %v505
        %vm515 = vcmask 523264
        %v517 = vsel %vm515, %v482, 0
        %519 = vmatpush.bf16.msra.mxu0 0
        %520 = vmatpush.bf16.msra.mxu0 0
        %521 = vmatpush.bf16.msra.mxu0 0
        %522 = vmatpush.bf16.msra.mxu0 0
        %523 = vmatpush.bf16.msra.mxu0 %v510
        %524 = vmatpush.bf16.msra.mxu0 %v509
        %525 = vmatpush.bf16.msra.mxu0 %v508
        %526 = vmatpush.bf16.msra.mxu0 %v507
        %527 = vmatmul.bf16.gmra.mxu0 %v517
        %v528 = vpop.f32.mrf.mxu0
        %v529 = vadd.f32 0.0, %v528
        %v530 = vpop.f32.mrf.mxu0
        %531 = vdwg.mxu0
        %v532 = vld [vmem:[#allocation4] sm:$0xff]
        %v533 = vld [vmem:[#allocation6] sm:$0xff]
        %v534 = vpack.c.bf16 %v529, %v529
        %v535 = vld [vmem:[%s2] sm:$0xf]
        %v536 = vld [vmem:[%s2 + $0x4] sm:$0xf]
        %v537 = vld [vmem:[%s2 + $0x8] sm:$0xf]
        %v538 = vld [vmem:[%s2 + $0xc] sm:$0xf]
        %v539 = vpack.c.bf16 %v532, %v532
        %v540 = vld [vmem:[%s3] sm:$0xf]
        %v541 = vld [vmem:[%s3 + $0x4] sm:$0xf]
        %v542 = vld [vmem:[%s3 + $0x8] sm:$0xf]
        %v543 = vld [vmem:[%s3 + $0xc] sm:$0xf]
        %v548 = vunpack.c.l.b16 %v540
        %v549 = vunpack.c.l.b16 %v541
        %v550 = vunpack.c.l.b16 %v542
        %v551 = vunpack.c.l.b16 %v543
        %v552 = vpack.c.b16 %v549, %v548
        %v553 = vpack.c.b16 %v551, %v550
        %vm556 = vcmask 261120
        %v558 = vsel %vm556, %v539, 0
        %560 = vmatpush.bf16.msra.mxu0 0
        %561 = vmatpush.bf16.msra.mxu0 0
        %562 = vmatpush.bf16.msra.mxu0 0
        %563 = vmatpush.bf16.msra.mxu0 0
        %564 = vmatpush.bf16.msra.mxu0 0
        %565 = vmatpush.bf16.msra.mxu0 0
        %566 = vmatpush.bf16.msra.mxu0 %v553
        %567 = vmatpush.bf16.msra.mxu0 %v552
        %568 = vmatmul.bf16.gmra.mxu0 %v558
        %v569 = vpop.f32.mrf.mxu0
        %v570 = vadd.f32 0.0, %v569
        %v571 = vpop.f32.mrf.mxu0
        %572 = vdwg.mxu0
        %v577 = vunpack.c.l.b16 %v535
        %v578 = vunpack.c.l.b16 %v536
        %v579 = vunpack.c.l.b16 %v537
        %v580 = vunpack.c.l.b16 %v538
        %v581 = vpack.c.b16 %v578, %v577
        %v582 = vpack.c.b16 %v580, %v579
        %v586 = vsel %vm556, %v534, 0
        %588 = vmatpush.bf16.msra.mxu0 0
        %589 = vmatpush.bf16.msra.mxu0 0
        %590 = vmatpush.bf16.msra.mxu0 0
        %591 = vmatpush.bf16.msra.mxu0 0
        %592 = vmatpush.bf16.msra.mxu0 0
        %593 = vmatpush.bf16.msra.mxu0 0
        %594 = vmatpush.bf16.msra.mxu0 %v582
        %595 = vmatpush.bf16.msra.mxu0 %v581
        %596 = vmatmul.bf16.gmra.mxu0 %v586
        %v597 = vpop.f32.mrf.mxu0
        %v598 = vadd.f32 %v570, %v597
        %v599 = vpop.f32.mrf.mxu0
        %600 = vdwg.mxu0
        %v601 = vld [vmem:[%s4] sm:$0x1]
        %v603 = vperm.slane %v601, 0
        %v605 = vadd.f32 %v598, %v603
        %v606 = vxor.u32 %v605, 2147483648
        %v607 = vmul.f32 %v606, 1.442695
        %v608 = vpow.pop %v607
        %v609 = vadd.f32 %v608, 1.0
        %v610 = vrcp.pop %v609
        %v611 = vmul.f32 %v609, %v610
        %v612 = vsub.f32 1.0, %v611
        %v613 = vmul.f32 %v610, %v612
        %v614 = vadd.f32 %v610, %v613
        %vm615 = vweird.f32 %v609
        %vm616 = vweird.f32 %v610
        %vm617 = vmor %vm615, %vm616
        %v618 = vsel %vm617, %v610, %v614
        %v619 = vand.u32 2147483647, %v609
        %vm620 = vcmp.eq.f32.partialorder %v619, 8.507059e+37
        %v621 = vand.u32 %v609, 2147483648
        %v622 = vor.u32 1.1754944e-38, %v621
        %v623 = vsel %vm620, %v622, %v618
        %v624 = vmul.f32 1.0, %v623
        %v625 = vtanh.pop %v605
        %627 = vrot.lane.b32.xlu0 %v533, 32
        %v628 = vpop.permute.xlu0 %627
        %v630 = vmul.f32 %v624, %v628
        %632 = vrot.lane.b32.xlu0 %v625, 32
        %v633 = vpop.permute.xlu0 %632
        %v635 = vmul.f32 %v624, %v633
        %637 = vrot.lane.b32.xlu0 %v635, 32
        %v638 = vpop.permute.xlu0 %637
        %v640 = vadd.f32 %v630, %v638
        %v641 = vtanh.pop %v640
        %643 = vrot.lane.b32.xlu0 %v641, 32
        %v644 = vpop.permute.xlu0 %643
        %v646 = vmul.f32 %v624, %v644
        %648 = vrot.lane.b32.xlu0 %v646, 64
        %v649 = vpop.permute.xlu0 %648
        %651 = vst.msk [vmem:[#allocation4] sm:$0xff] %vm556, %v649
        %653 = vrot.lane.b32.xlu0 %v640, 96
        %v654 = vpop.permute.xlu0 %653
        %656 = vst.msk [vmem:[#allocation6] sm:$0xff] %vm556, %v654
        %s657 = scalar_lea.vmem [#allocation4], 8
        %v658 = vld [vmem:[%s657] sm:$0xff]
        %s659 = scalar_lea.vmem [#allocation6], 8
        %v660 = vld [vmem:[%s659] sm:$0xff]
        %v661 = vpack.c.bf16 %v646, %v646
        %v662 = vld [vmem:[%s5] sm:$0xf]
        %v663 = vld [vmem:[%s5 + $0x4] sm:$0xf]
        %v664 = vld [vmem:[%s5 + $0x8] sm:$0xf]
        %v665 = vld [vmem:[%s5 + $0xc] sm:$0xf]
        %v666 = vpack.c.bf16 %v658, %v658
        %v667 = vld [vmem:[%s6] sm:$0xf]
        %v668 = vld [vmem:[%s6 + $0x4] sm:$0xf]
        %v669 = vld [vmem:[%s6 + $0x8] sm:$0xf]
        %v670 = vld [vmem:[%s6 + $0xc] sm:$0xf]
        %v675 = vunpack.c.l.b16 %v667
        %v676 = vunpack.c.l.b16 %v668
        %v677 = vunpack.c.l.b16 %v669
        %v678 = vunpack.c.l.b16 %v670
        %v679 = vpack.c.b16 %v676, %v675
        %v680 = vpack.c.b16 %v678, %v677
        %v684 = vsel %vm556, %v666, 0
        %686 = vmatpush.bf16.msra.mxu0 0
        %687 = vmatpush.bf16.msra.mxu0 0
        %688 = vmatpush.bf16.msra.mxu0 0
        %689 = vmatpush.bf16.msra.mxu0 0
        %690 = vmatpush.bf16.msra.mxu0 0
        %691 = vmatpush.bf16.msra.mxu0 0
        %692 = vmatpush.bf16.msra.mxu0 %v680
        %693 = vmatpush.bf16.msra.mxu0 %v679
        %694 = vmatmul.bf16.gmra.mxu0 %v684
        %v695 = vpop.f32.mrf.mxu0
        %v696 = vadd.f32 0.0, %v695
        %v697 = vpop.f32.mrf.mxu0
        %698 = vdwg.mxu0
        %700 = vrot.lane.b32.xlu0 %v661, 64
        %v701 = vpop.permute.xlu0 %700
        %v706 = vunpack.c.l.b16 %v662
        %v707 = vunpack.c.l.b16 %v663
        %v708 = vunpack.c.l.b16 %v664
        %v709 = vunpack.c.l.b16 %v665
        %v710 = vpack.c.b16 %v707, %v706
        %v711 = vpack.c.b16 %v709, %v708
        %v715 = vsel %vm556, %v701, 0
        %717 = vmatpush.bf16.msra.mxu0 0
        %718 = vmatpush.bf16.msra.mxu0 0
        %719 = vmatpush.bf16.msra.mxu0 0
        %720 = vmatpush.bf16.msra.mxu0 0
        %721 = vmatpush.bf16.msra.mxu0 0
        %722 = vmatpush.bf16.msra.mxu0 0
        %723 = vmatpush.bf16.msra.mxu0 %v711
        %724 = vmatpush.bf16.msra.mxu0 %v710
        %725 = vmatmul.bf16.gmra.mxu0 %v715
        %v726 = vpop.f32.mrf.mxu0
        %v727 = vadd.f32 %v696, %v726
        %v728 = vpop.f32.mrf.mxu0
        %729 = vdwg.mxu0
        %v730 = vld [vmem:[%s7] sm:$0x1]
        %v732 = vperm.slane %v730, 0
        %v734 = vadd.f32 %v727, %v732
        %v735 = vxor.u32 %v734, 2147483648
        %v736 = vmul.f32 %v735, 1.442695
        %v737 = vpow.pop %v736
        %v738 = vadd.f32 %v737, 1.0
        %v739 = vrcp.pop %v738
        %v740 = vmul.f32 %v738, %v739
        %v741 = vsub.f32 1.0, %v740
        %v742 = vmul.f32 %v739, %v741
        %v743 = vadd.f32 %v739, %v742
        %vm744 = vweird.f32 %v738
        %vm745 = vweird.f32 %v739
        %vm746 = vmor %vm744, %vm745
        %v747 = vsel %vm746, %v739, %v743
        %v748 = vand.u32 2147483647, %v738
        %vm749 = vcmp.eq.f32.partialorder %v748, 8.507059e+37
        %v750 = vand.u32 %v738, 2147483648
        %v751 = vor.u32 1.1754944e-38, %v750
        %v752 = vsel %vm749, %v751, %v747
        %v753 = vmul.f32 1.0, %v752
        %v754 = vtanh.pop %v734
        %756 = vrot.lane.b32.xlu0 %v660, 32
        %v757 = vpop.permute.xlu0 %756
        %v759 = vmul.f32 %v753, %v757
        %761 = vrot.lane.b32.xlu0 %v754, 32
        %v762 = vpop.permute.xlu0 %761
        %v764 = vmul.f32 %v753, %v762
        %766 = vrot.lane.b32.xlu0 %v764, 32
        %v767 = vpop.permute.xlu0 %766
        %v769 = vadd.f32 %v759, %v767
        %v770 = vtanh.pop %v769
        %772 = vrot.lane.b32.xlu0 %v770, 32
        %v773 = vpop.permute.xlu0 %772
        %v775 = vmul.f32 %v753, %v773
        %777 = vrot.lane.b32.xlu0 %v775, 64
        %v778 = vpop.permute.xlu0 %777
        %780 = vst.msk [vmem:[%s657] sm:$0xff] %vm556, %v778
        %782 = vrot.lane.b32.xlu0 %v769, 96
        %v783 = vpop.permute.xlu0 %782
        %785 = vst.msk [vmem:[%s659] sm:$0xff] %vm556, %v783
        %v786 = vpack.c.bf16 %v775, %v775
        %v787 = vld [vmem:[%s8] sm:$0xf]
        %v788 = vld [vmem:[%s8 + $0x4] sm:$0xf]
        %v789 = vld [vmem:[%s8 + $0x8] sm:$0xf]
        %v790 = vld [vmem:[%s8 + $0xc] sm:$0xf]
        %v791 = vld [vmem:[%s9] sm:$0x1]
        %v793 = vperm.slane %v791, 0
        %796 = vrot.lane.b32.xlu0 %v786, 64
        %v797 = vpop.permute.xlu0 %796
        %v802 = vunpack.c.l.b16 %v787
        %v803 = vunpack.c.l.b16 %v788
        %v804 = vunpack.c.l.b16 %v789
        %v805 = vunpack.c.l.b16 %v790
        %v806 = vpack.c.b16 %v803, %v802
        %v807 = vpack.c.b16 %v805, %v804
        %v811 = vsel %vm556, %v797, 0
        %813 = vmatpush.bf16.msra.mxu0 0
        %814 = vmatpush.bf16.msra.mxu0 0
        %815 = vmatpush.bf16.msra.mxu0 0
        %816 = vmatpush.bf16.msra.mxu0 0
        %817 = vmatpush.bf16.msra.mxu0 0
        %818 = vmatpush.bf16.msra.mxu0 0
        %819 = vmatpush.bf16.msra.mxu0 %v807
        %820 = vmatpush.bf16.msra.mxu0 %v806
        %821 = vmatmul.bf16.gmra.mxu0 %v811
        %v822 = vpop.f32.mrf.mxu0
        %v823 = vadd.f32 %v793, %v822
        %v824 = vpop.f32.mrf.mxu0
        %825 = vdwg.mxu0
        %826 = vst [vmem:[%s450] sm:$0xff] %v823
        %s827 = sand.u32 %s295, 1
        %s828 = scalar_lea.sflag [#allocation3], %s827
        %s829 = sand.u32 %s295, 1
        %s830 = smul.addr %s829, 8
        %s831 = scalar_lea.vmem [#allocation2], %s830
        // Predicated region
        $region73: #{decoder_decode.1} parent=67 // pred_check
          %p832 = pneg %p305
        $region74: #{decoder_decode.1} parent=67 // pred_check_branch
          %834 = sbr.rel (%p832) target = $region76
        $region75: #{decoder_decode.1} parent=67 // pred_region
          %836 = vsyncadd %s828, 0
          %s837 = smul.addr %s30, 8
          %s838 = scalar_lea.hbm %s12, %s837
          %s840 = sshll.u32 %s831, 4
          %s841 = int_to_ptr.vmem [resolvable:$true] %s840
          %s842 = sshll.u32 %s838, 4
          %s843 = int_to_ptr.hbm [resolvable:$true] %s842
          %845 = dma.vmem_to_hbm [thread:$0]  %s841, 128, %s843, %s828
        $region76: #{decoder_decode.1} parent=67 // pred_fallthru
          _
        // Predicated region
        $region77: #{decoder_decode.1} parent=67 // pred_check
          %p846 = pneg %p326
        $region78: #{decoder_decode.1} parent=67 // pred_check_branch
          %848 = sbr.rel (%p846) target = $region80
        $region79: #{decoder_decode.1} parent=67 // pred_region
          %850 = vsyncadd [#allocation5], 0
          %s851 = sshll.u32 [#allocation4], 4
          %s852 = int_to_ptr.vmem [resolvable:$true] %s851
          %s853 = sshll.u32 %s13, 4
          %s854 = int_to_ptr.hbm [resolvable:$true] %s853
          %859 = dma.vmem_to_hbm [thread:$0]  %s852, 256, %s854, [#allocation5], 128, 128, 8
        $region80: #{decoder_decode.1} parent=67 // pred_fallthru
          _
        // Predicated region
        $region81: #{decoder_decode.1} parent=67 // pred_check
          %p860 = pneg %p347
        $region82: #{decoder_decode.1} parent=67 // pred_check_branch
          %862 = sbr.rel (%p860) target = $region84
        $region83: #{decoder_decode.1} parent=67 // pred_region
          %864 = vsyncadd [#allocation5], 0
          %s865 = sshll.u32 [#allocation6], 4
          %s866 = int_to_ptr.vmem [resolvable:$true] %s865
          %s867 = sshll.u32 %s14, 4
          %s868 = int_to_ptr.hbm [resolvable:$true] %s867
          %873 = dma.vmem_to_hbm [thread:$0]  %s866, 256, %s868, [#allocation5], 128, 128, 8
        $region84: #{decoder_decode.1} parent=67 // pred_fallthru
          _
        // Predicated region
        $region85: #{decoder_decode.1} parent=67 // pred_check
          %p874 = pneg %p326
        $region86: #{decoder_decode.1} parent=67 // pred_check_branch
          %876 = sbr.rel (%p874) target = $region88
        $region87: #{decoder_decode.1} parent=67 // pred_region
          %878 = dma.done [#allocation5], 256
        $region88: #{decoder_decode.1} parent=67 // pred_fallthru
          _
        // Predicated region
        $region89: #{decoder_decode.1} parent=67 // pred_check
          %p879 = pneg %p347
        $region90: #{decoder_decode.1} parent=67 // pred_check_branch
          %881 = sbr.rel (%p879) target = $region92
        $region91: #{decoder_decode.1} parent=67 // pred_region
          %883 = dma.done [#allocation5], 256
        $region92: #{decoder_decode.1} parent=67 // pred_fallthru
          _
      $region68: #{decoder_decode.1} parent=5 // pred_fallthru
        _
      %p884 = scmp.le.s32.totalorder 2, %s25
      // Predicated region
      $region93: #{decoder_decode.1} parent=5 // pred_check
        %p885 = pneg %p884
      $region94: #{decoder_decode.1} parent=5 // pred_check_branch
        %887 = sbr.rel (%p885) target = $region96
      $region95: #{decoder_decode.1} parent=5 // pred_region
        %s888 = ssub.s32 %s25, 2
        // Predicated region
        $region97: #{decoder_decode.1} parent=95 // pred_check
          %p889 = pneg %p311
        $region98: #{decoder_decode.1} parent=95 // pred_check_branch
          %891 = sbr.rel (%p889) target = $region100
        $region99: #{decoder_decode.1} parent=95 // pred_region
          %s892 = sand.u32 %s296, 1
          %s893 = scalar_lea.sflag [#allocation3], %s892
          %s894 = sand.u32 %s296, 1
          %s895 = smul.addr %s894, 8
          %s896 = scalar_lea.vmem [#allocation2], %s895
          %898 = dma.done %s893, 128
        $region100: #{decoder_decode.1} parent=95 // pred_fallthru
          _
      $region96: #{decoder_decode.1} parent=5 // pred_fallthru
        _
    $region6: #{decoder_decode.1} parent=1 // loop_footer
      %s29 = sadd.s32 1, %s25
    $region7: #{decoder_decode.1} parent=1 // loop_footer_branch
      %24 = sbr.rel target = $region3
    $region8: #{decoder_decode.1} parent=1 // loop_exit
      _
    %899 = vsyncpa [#allocation3], 1
    %s900 = scalar_lea.sflag [#allocation3], 1
    %901 = vsyncpa %s900, 1
    %902 = vsyncpa [#allocation5], 1

</llo_original>
